<compile_context>
chip_gen: v6e
topology: v6e:2x2x1
jax: 0.10.0
libtpu: 0.0.40
codegen_flags: <defaults>
</compile_context>

<pallas_src>
import functools

import jax
import jax.numpy as jnp
from jax.experimental import pallas as pl
from jax.experimental.pallas import tpu as pltpu

_LANES = 128


def _round_up(x, m):
    return ((x + m - 1) // m) * m


def _coral_partial_kernel(x_ref, lv_ref, out_ref, acc_ref):
    """Accumulate element-wise partial sums of the CORAL term.

    x_ref / lv_ref : (block_rows, 128) input tiles
    out_ref        : (8, 128) per-core partial-sum output (written once)
    acc_ref        : (8, 128) f32 VMEM scratch accumulator
    """
    i = pl.program_id(1)  # inner (reduction) grid axis

    @pl.when(i == 0)
    def _init():
        acc_ref[...] = jnp.zeros_like(acc_ref)

    x = x_ref[...].astype(jnp.float32)
    lv = lv_ref[...].astype(jnp.float32)

    # Numerically stable logsigmoid(x) = min(x, 0) - log1p(exp(-|x|))
    log_sig = jnp.minimum(x, 0.0) - jnp.log1p(jnp.exp(-jnp.abs(x)))

    # log_sig*lv + (log_sig - x)*(1 - lv)  ==  log_sig - x*(1 - lv)
    term = log_sig - x * (1.0 - lv)

    # Fold the (block_rows, 128) tile down to a vreg-shaped (8, 128) partial
    # with pure VPU adds; the single cross-lane reduce is deferred to the
    # wrapper (tiny array).
    acc_ref[...] += jnp.sum(term.reshape(-1, 8, _LANES), axis=0)

    @pl.when(i == pl.num_programs(1) - 1)
    def _finalize():
        out_ref[...] = acc_ref[...]


@functools.partial(jax.jit, static_argnames=("block_rows", "num_cores"))
def coral_loss(logits, levels, *, block_rows=1024, num_cores=2):
    """logits, levels: [N, K] arrays (f32 or bf16). Returns scalar f32 loss."""
    assert logits.shape == levels.shape and logits.ndim == 2
    n, k = logits.shape
    total = n * k

    # ---- derive lane-dense tiling (all static Python ints) ----
    rows_min = pl.cdiv(total, _LANES)              # 128-lane rows needed
    per_core_min = pl.cdiv(rows_min, num_cores)    # rows per TensorCore
    br = min(block_rows, _round_up(per_core_min, 8))
    br = _round_up(br, 8)                          # sublane-aligned block rows
    per_core_rows = _round_up(per_core_min, br)
    padded_rows = per_core_rows * num_cores
    n_inner = per_core_rows // br

    # ---- flatten + exact-zero padding ----
    x_flat = logits.reshape(-1)
    lv_flat = levels.reshape(-1)
    pad = padded_rows * _LANES - total
    if pad:
        # logsigmoid(1e4) == 0 exactly in f32 and (1 - 1) == 0  ->  term == 0.
        x_flat = jnp.concatenate(
            [x_flat, jnp.full((pad,), 1e4, dtype=logits.dtype)])
        lv_flat = jnp.concatenate(
            [lv_flat, jnp.ones((pad,), dtype=levels.dtype)])
    x2 = x_flat.reshape(padded_rows, _LANES)
    lv2 = lv_flat.reshape(padded_rows, _LANES)

    partials = pl.pallas_call(
        _coral_partial_kernel,
        out_shape=jax.ShapeDtypeStruct((num_cores * 8, _LANES), jnp.float32),
        grid_spec=pltpu.PrefetchScalarGridSpec(
            num_scalar_prefetch=0,
            grid=(num_cores, n_inner),
            in_specs=[
                pl.BlockSpec((br, _LANES), lambda p, i: (p * n_inner + i, 0)),
                pl.BlockSpec((br, _LANES), lambda p, i: (p * n_inner + i, 0)),
            ],
            out_specs=pl.BlockSpec((8, _LANES), lambda p, i: (p, 0)),
            scratch_shapes=[pltpu.VMEM((8, _LANES), jnp.float32)],
        ),
        compiler_params=pltpu.CompilerParams(
            dimension_semantics=("parallel", "arbitrary"),
        ),
    )(x2, lv2)

    # Tiny final reduce + mean/negate scale (exact: -sum(all)/N == mean(-row sums)).
    return jnp.sum(partials) * (-1.0 / n)


def _reference_loss(logits, levels):
    # Pure-JAX reference mirroring the PyTorch code (unsimplified form).
    x = logits.astype(jnp.float32)
    lv = levels.astype(jnp.float32)
    log_sig = jax.nn.log_sigmoid(x)
    val = -jnp.sum(log_sig * lv + (log_sig - x) * (1.0 - lv), axis=1)
    return jnp.mean(val)


if __name__ == "__main__":
    key = jax.random.PRNGKey(0)
    k1, k2, k3, k4 = jax.random.split(key, 4)

    # Small shapes consistent with the module: batch N, K ordinal thresholds.
    N, K = 8, 16
    logits = jax.random.normal(k1, (N, K), dtype=jnp.float32) * 2.0
    levels = (jax.random.uniform(k2, (N, K)) > 0.5).astype(jnp.float32)
    loss = coral_loss(logits, levels)
    jax.block_until_ready(loss)
    ref = _reference_loss(logits, levels)
    assert jnp.allclose(loss, ref, rtol=1e-5, atol=1e-4), (loss, ref)

    # Ragged size (N*K not a multiple of 128): exercises exact-zero padding.
    N2, K2 = 13, 7
    logits2 = jax.random.normal(k3, (N2, K2), dtype=jnp.float32) * 3.0
    levels2 = (jax.random.uniform(k4, (N2, K2)) > 0.5).astype(jnp.float32)
    loss2 = coral_loss(logits2, levels2)
    jax.block_until_ready(loss2)
    ref2 = _reference_loss(logits2, levels2)
    assert jnp.allclose(loss2, ref2, rtol=1e-5, atol=1e-4), (loss2, ref2)

    # Force multiple inner reduction steps (n_inner > 1) with a tiny block.
    N3, K3 = 64, 64
    logits3 = jax.random.normal(k1, (N3, K3), dtype=jnp.float32)
    levels3 = (jax.random.uniform(k2, (N3, K3)) > 0.5).astype(jnp.float32)
    loss3 = coral_loss(logits3, levels3, block_rows=8)
    jax.block_until_ready(loss3)
    ref3 = _reference_loss(logits3, levels3)
    assert jnp.allclose(loss3, ref3, rtol=1e-5, atol=1e-4), (loss3, ref3)

    print("KERNEL_OK")
</pallas_src>

<mosaic_0001>
module attributes {stable_mosaic.version = 11 : i64} {
  func.func @_coral_partial_kernel(%arg0: i32, %arg1: i32, %arg2: memref<8x128xf32, #tpu.memory_space<vmem>>, %arg3: memref<8x128xf32, #tpu.memory_space<vmem>>, %arg4: memref<8x128xf32, #tpu.memory_space<vmem>>, %arg5: memref<8x128xf32, #tpu.memory_space<vmem>>) attributes {dimension_semantics = [#tpu.dimension_semantics<parallel>, #tpu.dimension_semantics<arbitrary>], iteration_bounds = array<i64: 2, 1>, scalar_prefetch = 0 : i64, scratch_operands = 1 : i64, tpu.core_type = #tpu.core_type<tc>, window_params = [{transform_indices = @transform_0, window_bounds = array<i64: 8, 128>}, {transform_indices = @transform_1, window_bounds = array<i64: 8, 128>}, {transform_indices = @transform_2, window_bounds = array<i64: 8, 128>}]} {
    %c0_i32 = arith.constant 0 : i32
    %0 = arith.cmpi eq, %arg1, %c0_i32 : i32
    %1 = arith.extui %0 : i1 to i32
    %c0_i32_0 = arith.constant 0 : i32
    %2 = arith.cmpi ne, %1, %c0_i32_0 : i32
    scf.if %2 {
      %cst_13 = arith.constant 0.000000e+00 : f32
      %25 = vector.broadcast %cst_13 : f32 to vector<8x128xf32>
      %c0_14 = arith.constant 0 : index
      %c0_15 = arith.constant 0 : index
      %26 = vector.load %arg5[%c0_14, %c0_15] : memref<8x128xf32, #tpu.memory_space<vmem>>, vector<8x128xf32>
      tpu.vector_store %arg5[%c0_14, %c0_15], %25 {strides = array<i32>} : memref<8x128xf32, #tpu.memory_space<vmem>>, vector<8x128xf32>,
    } else {
    }
    %c0 = arith.constant 0 : index
    %c0_1 = arith.constant 0 : index
    %3 = vector.load %arg2[%c0, %c0_1] : memref<8x128xf32, #tpu.memory_space<vmem>>, vector<8x128xf32>
    %c0_2 = arith.constant 0 : index
    %c0_3 = arith.constant 0 : index
    %4 = vector.load %arg3[%c0_2, %c0_3] : memref<8x128xf32, #tpu.memory_space<vmem>>, vector<8x128xf32>
    %cst = arith.constant 0.000000e+00 : f32
    %5 = vector.broadcast %cst : f32 to vector<8x128xf32>
    %6 = arith.minimumf %3, %5 : vector<8x128xf32>
    %7 = math.absf %3 : vector<8x128xf32>
    %cst_4 = arith.constant 0.000000e+00 : f32
    %8 = vector.broadcast %cst_4 : f32 to vector<8x128xf32>
    %9 = arith.subf %8, %7 : vector<8x128xf32>
    %10 = math.exp %9 : vector<8x128xf32>
    %11 = math.log1p %10 : vector<8x128xf32>
    %12 = arith.subf %6, %11 : vector<8x128xf32>
    %cst_5 = arith.constant 1.000000e+00 : f32
    %13 = vector.broadcast %cst_5 : f32 to vector<8x128xf32>
    %14 = arith.subf %13, %4 : vector<8x128xf32>
    %15 = arith.mulf %3, %14 : vector<8x128xf32>
    %16 = arith.subf %12, %15 : vector<8x128xf32>
    %c0_6 = arith.constant 0 : index
    %c0_7 = arith.constant 0 : index
    %17 = vector.load %arg5[%c0_6, %c0_7] : memref<8x128xf32, #tpu.memory_space<vmem>>, vector<8x128xf32>
    %18 = vector.shape_cast %16 : vector<8x128xf32> to vector<1x8x128xf32>
    %cst_8 = arith.constant dense<0.000000e+00> : vector<8x128xf32>
    %19 = vector.multi_reduction <add>, %18, %cst_8 [0] : vector<1x8x128xf32> to vector<8x128xf32>
    %20 = arith.addf %17, %19 : vector<8x128xf32>
    %c0_9 = arith.constant 0 : index
    %c0_10 = arith.constant 0 : index
    %21 = vector.load %arg5[%c0_9, %c0_10] : memref<8x128xf32, #tpu.memory_space<vmem>>, vector<8x128xf32>
    tpu.vector_store %arg5[%c0_9, %c0_10], %20 {strides = array<i32>} : memref<8x128xf32, #tpu.memory_space<vmem>>, vector<8x128xf32>,
    %c0_i32_11 = arith.constant 0 : i32
    %22 = arith.cmpi eq, %arg1, %c0_i32_11 : i32
    %23 = arith.extui %22 : i1 to i32
    %c0_i32_12 = arith.constant 0 : i32
    %24 = arith.cmpi ne, %23, %c0_i32_12 : i32
    scf.if %24 {
      %c0_13 = arith.constant 0 : index
      %c0_14 = arith.constant 0 : index
      %25 = vector.load %arg5[%c0_13, %c0_14] : memref<8x128xf32, #tpu.memory_space<vmem>>, vector<8x128xf32>
      %c0_15 = arith.constant 0 : index
      %c0_16 = arith.constant 0 : index
      %26 = vector.load %arg4[%c0_15, %c0_16] : memref<8x128xf32, #tpu.memory_space<vmem>>, vector<8x128xf32>
      tpu.vector_store %arg4[%c0_15, %c0_16], %25 {strides = array<i32>} : memref<8x128xf32, #tpu.memory_space<vmem>>, vector<8x128xf32>,
    } else {
    }
    return
  }
  func.func @transform_0(%arg0: i32, %arg1: i32) -> (i32, i32) {
    %c1_i32 = arith.constant 1 : i32
    %0 = arith.muli %arg0, %c1_i32 : i32
    %1 = arith.addi %0, %arg1 : i32
    %c0_i32 = arith.constant 0 : i32
    %c0_i32_0 = arith.constant 0 : i32
    return %1, %c0_i32 : i32, i32
  }
  func.func @transform_1(%arg0: i32, %arg1: i32) -> (i32, i32) {
    %c1_i32 = arith.constant 1 : i32
    %0 = arith.muli %arg0, %c1_i32 : i32
    %1 = arith.addi %0, %arg1 : i32
    %c0_i32 = arith.constant 0 : i32
    %c0_i32_0 = arith.constant 0 : i32
    return %1, %c0_i32 : i32, i32
  }
  func.func @transform_2(%arg0: i32, %arg1: i32) -> (i32, i32) {
    %c0_i32 = arith.constant 0 : i32
    %c0_i32_0 = arith.constant 0 : i32
    return %arg0, %c0_i32 : i32, i32
  }
}

</mosaic_0001>

<llo_original>
// kernel: coral_loss.1
$region0: #{coral_loss.1}
  #allocation0 [shape = 'u32[]', space=smem, size = 0x4, offset = 0x4, fixed_abs, tag = 'smem constant byte address 0x4 - core index']
  #allocation1 [shape = 'u32[144,128]{1,0:T(1,128)}', space=vmem, size = 0x12000, scoped, tag = 'internal scratch']
  #allocation2 [shape = 'f32[8,128]{1,0:T(8,128)}', space=vmem, size = 0x1000, scoped, tag = 'scratch operand']
  %s0 = inlined_call_operand.vmem [shape: f32[16,128], index: 0, kind: input, shape index: {}]
  %s1 = inlined_call_operand.vmem [shape: f32[16,128], index: 1, kind: input, shape index: {}]
  %s2 = inlined_call_operand.vmem [shape: f32[16,128], index: 2, kind: output, shape index: {}]
  %s3 = sld [smem:[#allocation0]]
  $region49: #{coral_loss.1} parent=0
    _
  %s5 = ssub.s32 1, %s3
  %s6 = scalar_select 0, %s5, %s3
  loop: start=0, step=1, limit=4
  $region2: #{coral_loss.1} parent=0 // loop_pre_header
    _
  $region3: #{coral_loss.1} parent=0 // loop_header
    %s8 = sphi 0, %s12
    %p9 = scmp.ge.s32.totalorder %s8, 4
    %s15 = sphi 0, %s27
    %s16 = sphi 0, %s23
    %s17 = sphi 0, %s15
    %s18 = sphi 0, %s16
    %s19 = sphi 0, %s17
    %s20 = sphi 0, %s18
    %s32 = sphi 0, %s34
    %s35 = sphi 0, %s32
    %s36 = sphi 0, %s35
    %s52 = sphi 0, %s36
    %s60 = sphi 0, %s62
    %s63 = sphi 0, %s60
    %s64 = sphi 0, %s63
    %s80 = sphi 0, %s64
    %s86 = sphi 0, %s88
    %s89 = sphi 0, %s86
    %s90 = sphi 0, %s89
    %s106 = sphi 0, %s90
  $region4: #{coral_loss.1} parent=0 // loop_header_branch
    %11 = sbr.rel (%p9) target = $region8
  $region5: #{coral_loss.1} parent=0 // loop_body
    %s13 = ssub.s32 %s8, 1
    %s14 = ssub.s32 %s8, 2
    %s21 = sadd.s32 1, %s16
    %p22 = scmp.ge.s32.totalorder %s21, 1
    %s23 = scalar_select %p22, 0, %s21
    %s24 = sadd.s32 1, %s15
    %s25 = scalar_select %p22, %s24, %s15
    %p26 = scmp.ge.s32.totalorder %s25, 2
    %s27 = scalar_select %p26, 0, %s25
    %s28 = sadd.s32 %s15, %s16
    %s29 = sadd.s32 %s27, %s23
    %s30 = ssub.s32 %s28, %s29
    %p31 = scmp.eq.s32.totalorder %s30, 0
    %s33 = sadd.s32 %s32, 1
    %s34 = scalar_select %p31, %s32, %s33
    %p37 = pneg %p31
    %p38 = scmp.eq.s32.totalorder %s8, 1
    %p39 = por %p37, %p38
    %p40 = scmp.ne.s32.totalorder %s32, %s35
    %p41 = scmp.eq.s32.totalorder %s8, 0
    %p42 = por %p40, %p41
    %p43 = scmp.ne.s32.totalorder %s32, %s35
    %p44 = scmp.eq.s32.totalorder %s13, 1
    %p45 = por %p43, %p44
    %p46 = scmp.ne.s32.totalorder %s35, %s36
    %p47 = scmp.eq.s32.totalorder %s13, 0
    %p48 = por %p46, %p47
    %p49 = scmp.ne.s32.totalorder %s35, %s36
    %p50 = scmp.eq.s32.totalorder %s14, 1
    %p51 = por %p49, %p50
    %p53 = scmp.ne.s32.totalorder %s36, %s52
    %p54 = scmp.eq.s32.totalorder %s14, 0
    %p55 = por %p53, %p54
    %s56 = sadd.s32 %s15, %s16
    %s57 = sadd.s32 %s27, %s23
    %s58 = ssub.s32 %s56, %s57
    %p59 = scmp.eq.s32.totalorder %s58, 0
    %s61 = sadd.s32 %s60, 1
    %s62 = scalar_select %p59, %s60, %s61
    %p65 = pneg %p59
    %p66 = scmp.eq.s32.totalorder %s8, 1
    %p67 = por %p65, %p66
    %p68 = scmp.ne.s32.totalorder %s60, %s63
    %p69 = scmp.eq.s32.totalorder %s8, 0
    %p70 = por %p68, %p69
    %p71 = scmp.ne.s32.totalorder %s60, %s63
    %p72 = scmp.eq.s32.totalorder %s13, 1
    %p73 = por %p71, %p72
    %p74 = scmp.ne.s32.totalorder %s63, %s64
    %p75 = scmp.eq.s32.totalorder %s13, 0
    %p76 = por %p74, %p75
    %p77 = scmp.ne.s32.totalorder %s63, %s64
    %p78 = scmp.eq.s32.totalorder %s14, 1
    %p79 = por %p77, %p78
    %p81 = scmp.ne.s32.totalorder %s64, %s80
    %p82 = scmp.eq.s32.totalorder %s14, 0
    %p83 = por %p81, %p82
    %s84 = ssub.s32 %s15, %s27
    %p85 = scmp.eq.s32.totalorder %s84, 0
    %s87 = sadd.s32 %s86, 1
    %s88 = scalar_select %p85, %s86, %s87
    %p91 = pneg %p85
    %p92 = scmp.eq.s32.totalorder %s8, 1
    %p93 = por %p91, %p92
    %p94 = scmp.ne.s32.totalorder %s86, %s89
    %p95 = scmp.eq.s32.totalorder %s8, 0
    %p96 = por %p94, %p95
    %p97 = scmp.ne.s32.totalorder %s86, %s89
    %p98 = scmp.eq.s32.totalorder %s13, 1
    %p99 = por %p97, %p98
    %p100 = scmp.ne.s32.totalorder %s89, %s90
    %p101 = scmp.eq.s32.totalorder %s13, 0
    %p102 = por %p100, %p101
    %p103 = scmp.ne.s32.totalorder %s89, %s90
    %p104 = scmp.eq.s32.totalorder %s14, 1
    %p105 = por %p103, %p104
    %p107 = scmp.ne.s32.totalorder %s90, %s106
    %p108 = scmp.eq.s32.totalorder %s14, 0
    %p109 = por %p107, %p108
    %p110 = scmp.le.s32.totalorder 1, %s8
    %p111 = scmp.lt.s32.totalorder %s8, 3
    %p112 = pnand %p110, %p111
    %p113 = pneg %p112
    // Predicated region
    $region9: #{coral_loss.1} parent=5 // pred_check
      _
    $region10: #{coral_loss.1} parent=5 // pred_check_branch
      %115 = sbr.rel (%p112) target = $region12
    $region11: #{coral_loss.1} parent=5 // pred_region
      %s116 = ssub.s32 %s8, 1
    $region12: #{coral_loss.1} parent=5 // pred_fallthru
      _
    %p117 = scmp.lt.s32.totalorder %s8, 2
    // Predicated region
    $region13: #{coral_loss.1} parent=5 // pred_check
      %p118 = pneg %p117
    $region14: #{coral_loss.1} parent=5 // pred_check_branch
      %120 = sbr.rel (%p118) target = $region16
    $region15: #{coral_loss.1} parent=5 // pred_region
      // Predicated region
      $region17: #{coral_loss.1} parent=15 // pred_check
        %p121 = pneg %p42
      $region18: #{coral_loss.1} parent=15 // pred_check_branch
        %123 = sbr.rel (%p121) target = $region20
      $region19: #{coral_loss.1} parent=15 // pred_region
        %s124 = sadd.s32 %s15, %s16
        %p125 = scmp.lt.s32.totalorder %s124, 1
        %s126 = scalar_select %p125, %s124, 1
        %s127 = smul.addr %s126, 8
        %s128 = scalar_lea.vmem %s0, %s127
        %s129 = sadd.s32 %s15, %s16
      $region20: #{coral_loss.1} parent=15 // pred_fallthru
        _
      // Predicated region
      $region21: #{coral_loss.1} parent=15 // pred_check
        %p130 = pneg %p70
      $region22: #{coral_loss.1} parent=15 // pred_check_branch
        %132 = sbr.rel (%p130) target = $region24
      $region23: #{coral_loss.1} parent=15 // pred_region
        %s133 = sadd.s32 %s15, %s16
        %p134 = scmp.lt.s32.totalorder %s133, 1
        %s135 = scalar_select %p134, %s133, 1
        %s136 = smul.addr %s135, 8
        %s137 = scalar_lea.vmem %s1, %s136
        %s138 = sadd.s32 %s15, %s16
      $region24: #{coral_loss.1} parent=15 // pred_fallthru
        _
    $region16: #{coral_loss.1} parent=5 // pred_fallthru
      _
    %p139 = scmp.le.s32.totalorder 1, %s8
    %p140 = scmp.lt.s32.totalorder %s8, 3
    %p141 = pnand %p139, %p140
    %p142 = pneg %p141
    // Predicated region
    $region25: #{coral_loss.1} parent=5 // pred_check
      _
    $region26: #{coral_loss.1} parent=5 // pred_check_branch
      %144 = sbr.rel (%p141) target = $region28
    $region27: #{coral_loss.1} parent=5 // pred_region
      %s145 = ssub.s32 %s8, 1
      %s146 = sadd.s32 %s17, %s18
      %p147 = scmp.lt.s32.totalorder %s146, 1
      %s148 = scalar_select %p147, %s146, 1
      %s149 = smul.addr %s148, 8
      %s150 = scalar_lea.vmem %s0, %s149
      %p151 = pneg %p48
      %p152 = pneg %p45
      %s153 = sadd.s32 %s17, %s18
      %p154 = scmp.lt.s32.totalorder %s153, 1
      %s155 = scalar_select %p154, %s153, 1
      %s156 = smul.addr %s155, 8
      %s157 = scalar_lea.vmem %s1, %s156
      %p158 = pneg %p76
      %p159 = pneg %p73
      %p160 = pneg %p102
      %p161 = pneg %p99
      %p162 = scmp.lt.s32.totalorder %s17, 1
      %s163 = scalar_select %p162, %s17, 1
      %s164 = smul.addr %s163, 8
      %s165 = scalar_lea.vmem %s2, %s164
      %s166 = sadd.s32 %s17, %s18
      %p167 = scmp.lt.s32.totalorder %s166, 1
      %s168 = scalar_select %p167, %s166, 1
      %s169 = smul.addr %s168, 8
      %s170 = scalar_lea.vmem %s0, %s169
      %s171 = sadd.s32 %s17, %s18
      %s172 = sadd.s32 %s17, %s18
      %p173 = scmp.lt.s32.totalorder %s172, 1
      %s174 = scalar_select %p173, %s172, 1
      %s175 = smul.addr %s174, 8
      %s176 = scalar_lea.vmem %s1, %s175
      %s177 = sadd.s32 %s17, %s18
      %p178 = scmp.lt.s32.totalorder %s17, 1
      %s179 = scalar_select %p178, %s17, 1
      %s180 = smul.addr %s179, 8
      %s181 = scalar_lea.vmem %s2, %s180
      %p182 = scmp.eq.s32.totalorder %s18, 0
      // Predicated region
      $region29: #{coral_loss.1} parent=27 // pred_check
        %p183 = pneg %p182
      $region30: #{coral_loss.1} parent=27 // pred_check_branch
        %185 = sbr.rel (%p183) target = $region32
      $region31: #{coral_loss.1} parent=27 // pred_region
        %186 = vst [vmem:[#allocation2] sm:$0xff] 0.0
      $region32: #{coral_loss.1} parent=27 // pred_fallthru
        _
      %v187 = vld [vmem:[%s170] sm:$0xff]
      %v188 = vld [vmem:[%s176] sm:$0xff]
      %v189 = vmin.f32 %v187, 0.0
      %v190 = vand.u32 2147483647, %v187
      %v191 = vsub.f32 0.0, %v190
      %v192 = vmul.f32 %v191, 1.442695
      %v193 = vpow.pop %v192
      %v194 = vadd.f32 %v193, 1.0
      %v195 = vlog2.pop %v194
      %v196 = vmul.f32 %v195, 0.6931472
      %v197 = vmul.f32 -0.5, %v193
      %v198 = vadd.f32 %v197, 1.0
      %v199 = vmul.f32 %v198, %v193
      %v200 = vand.u32 2147483647, %v193
      %vm201 = vcmp.lt.f32.partialorder %v200, 0.0004427343
      %v202 = vsel %vm201, %v199, %v196
      %v203 = vsub.f32 %v189, %v202
      %v204 = vsub.f32 1.0, %v188
      %v205 = vmul.f32 %v187, %v204
      %v206 = vsub.f32 %v203, %v205
      %v207 = vld [vmem:[#allocation2] sm:$0xff]
      %v208 = vadd.f32 %v206, 0.0
      %v209 = vadd.f32 %v207, %v208
      %210 = vst [vmem:[#allocation2] sm:$0xff] %v209
      // Predicated region
      $region33: #{coral_loss.1} parent=27 // pred_check
        %p211 = pneg %p182
      $region34: #{coral_loss.1} parent=27 // pred_check_branch
        %213 = sbr.rel (%p211) target = $region36
      $region35: #{coral_loss.1} parent=27 // pred_region
        %v214 = vld [vmem:[#allocation2] sm:$0xff]
        %215 = vst [vmem:[%s181] sm:$0xff] %v214
      $region36: #{coral_loss.1} parent=27 // pred_fallthru
        _
      %p216 = scmp.lt.s32.totalorder %s17, 1
      %s217 = scalar_select %p216, %s17, 1
      %s218 = smul.addr %s217, 8
      %s219 = scalar_lea.vmem %s2, %s218
      // Predicated region
      $region37: #{coral_loss.1} parent=27 // pred_check
        %p220 = pneg %p99
      $region38: #{coral_loss.1} parent=27 // pred_check_branch
        %222 = sbr.rel (%p220) target = $region40
      $region39: #{coral_loss.1} parent=27 // pred_region
        _
      $region40: #{coral_loss.1} parent=27 // pred_fallthru
        _
    $region28: #{coral_loss.1} parent=5 // pred_fallthru
      _
    %p223 = scmp.le.s32.totalorder 2, %s8
    // Predicated region
    $region41: #{coral_loss.1} parent=5 // pred_check
      %p224 = pneg %p223
    $region42: #{coral_loss.1} parent=5 // pred_check_branch
      %226 = sbr.rel (%p224) target = $region44
    $region43: #{coral_loss.1} parent=5 // pred_region
      %s227 = ssub.s32 %s8, 2
      // Predicated region
      $region45: #{coral_loss.1} parent=43 // pred_check
        %p228 = pneg %p105
      $region46: #{coral_loss.1} parent=43 // pred_check_branch
        %230 = sbr.rel (%p228) target = $region48
      $region47: #{coral_loss.1} parent=43 // pred_region
        %p231 = scmp.lt.s32.totalorder %s19, 1
        %s232 = scalar_select %p231, %s19, 1
        %s233 = smul.addr %s232, 8
        %s234 = scalar_lea.vmem %s2, %s233
      $region48: #{coral_loss.1} parent=43 // pred_fallthru
        _
    $region44: #{coral_loss.1} parent=5 // pred_fallthru
      _
  $region6: #{coral_loss.1} parent=0 // loop_footer
    %s12 = sadd.s32 1, %s8
  $region7: #{coral_loss.1} parent=0 // loop_footer_branch
    %7 = sbr.rel target = $region3
  $region8: #{coral_loss.1} parent=0 // loop_exit
    _

</llo_original>
